<compile_context>
chip_gen: v7x
topology: tpu7x:2x2x1
jax: 0.10.0
libtpu: 0.0.40
codegen_flags: <defaults>
</compile_context>

<pallas_src>
import jax
import jax.numpy as jnp
from jax import lax
from jax.experimental import pallas as pl
from jax.experimental.pallas import tpu as pltpu


def _round_up(x, m):
    return (x + m - 1) // m * m


def _pick_tile(dim, candidates):
    """Largest candidate that evenly divides `dim`, else the full dim."""
    for c in candidates:
        if c <= dim and dim % c == 0:
            return c
    return dim


def _lm_head_kernel(y_ref, w_ref, b_ref, o_ref, acc_ref):
    # y_ref  : (TM, TK)  activations, rows = flattened (batch, seq)
    # w_ref  : (TN, TK)  weight tile, native nn.Linear (vocab, d_model) layout
    # b_ref  : (1, TN)   bias tile (f32)
    # o_ref  : (TM, TN)  logits tile
    # acc_ref: (TM, TN)  f32 accumulator, resident across the K grid axis
    k = pl.program_id(2)

    @pl.when(k == 0)
    def _init():
        # Fold the bias into the accumulator init: epilogue is then a pure
        # cast+store (no extra VPU add pass over the (TM, TN) block).
        acc_ref[...] = jnp.broadcast_to(
            b_ref[...].astype(jnp.float32), acc_ref.shape)

    # (TM, TK) x (TN, TK) contracted on the model dimension -> (TM, TN).
    acc_ref[...] += lax.dot_general(
        y_ref[...], w_ref[...],
        dimension_numbers=(((1,), (1,)), ((), ())),
        preferred_element_type=jnp.float32)

    @pl.when(k == pl.num_programs(2) - 1)
    def _finalize():
        o_ref[...] = acc_ref[...].astype(o_ref.dtype)


def post_continuous_block(y, weight, bias, out_dtype=None,
                          compute_dtype=jnp.bfloat16):
    """Forward pass of PostContinuousBlock.

    Args:
      y:      (seq, batch, model_dim) activations.
      weight: (vocab, model_dim)  -- PyTorch nn.Linear weight layout.
      bias:   (vocab,)
      out_dtype:     optional logits dtype (default: y.dtype).
      compute_dtype: matmul operand dtype (default bf16; accumulation is f32).
    Returns:
      dict with 'x': (batch, seq, vocab) logits.
    """
    seq, batch, d_model = y.shape
    vocab = weight.shape[0]
    out_dtype = y.dtype if out_dtype is None else out_dtype
    compute_dtype = y.dtype if compute_dtype is None else compute_dtype

    # Fold the module's transpose(0,1) into a cheap wrapper-side 2-D view of
    # the activations: (seq, batch, d) -> (batch, seq, d) -> (batch*seq, d).
    # y is tiny compared to the weight and the logits, so this copy is cheap.
    m = batch * seq
    y2d = jnp.transpose(y, (1, 0, 2)).reshape(m, d_model).astype(compute_dtype)
    w = weight.astype(compute_dtype)

    # Lane-dense output: pad vocab to a 128-lane multiple (no-op for 32k/128k).
    v_pad = _round_up(vocab, 128)
    if v_pad != vocab:
        w = jnp.pad(w, ((0, v_pad - vocab), (0, 0)))
        bias = jnp.pad(bias, ((0, v_pad - vocab),))
    bias2d = bias.reshape(1, v_pad).astype(jnp.float32)

    # --- Tile selection -----------------------------------------------------
    # TM = rows per weight pass (batch folded in).  Target ~1024 so the
    # (vocab x d_model) weight arithmetic intensity clears the compute-bound
    # threshold on v5e/v6e/v7x.
    if m <= 1024:
        m_pad = _round_up(m, 8)
        tm = m_pad
    else:
        m_pad = _round_up(m, 256)
        tm = _pick_tile(m_pad, (1024, 512, 256))
    if m_pad != m:
        y2d = jnp.pad(y2d, ((0, m_pad - m), (0, 0)))

    tn = _pick_tile(v_pad, (1024, 512, 256, 128))
    tk = _pick_tile(d_model, (1024, 512, 256, 128))

    in_b = jnp.dtype(compute_dtype).itemsize
    out_b = jnp.dtype(out_dtype).itemsize

    def vmem_est(tm_, tn_, tk_):
        return (tm_ * tn_ * 4              # f32 accumulator (single buffer)
                + 2 * tm_ * tk_ * in_b     # activation block, double-buffered
                + 2 * tn_ * tk_ * in_b     # weight block, double-buffered
                + 2 * tn_ * 4              # bias block (tiny)
                + 2 * tm_ * tn_ * out_b)   # output block, double-buffered

    # Conservative budget that fits v7x's 64 MiB VMEM with pipeline headroom.
    budget = 44 * 1024 * 1024
    while vmem_est(tm, tn, tk) > budget and tn > 128:
        tn //= 2
    while vmem_est(tm, tn, tk) > budget and tk > 128:
        tk //= 2
    while vmem_est(tm, tn, tk) > budget and tm > 256:
        tm //= 2
    vmem_limit = int(min(56 << 20, max(32 << 20, int(vmem_est(tm, tn, tk) * 1.5))))

    n_v = v_pad // tn
    n_m = m_pad // tm
    n_k = d_model // tk
    # Vocab-tile axis leads: plentiful, so megacore shards disjoint halves of
    # the weight across TensorCores.  Reduction (K) axis is last.
    grid = (n_v, n_m, n_k)

    flops = 2 * m_pad * d_model * v_pad
    bytes_accessed = (m_pad * d_model * in_b * n_v      # y re-read per vocab tile
                      + v_pad * d_model * in_b * n_m    # weight re-read per m tile
                      + v_pad * 4
                      + m_pad * v_pad * out_b)

    out2d = pl.pallas_call(
        _lm_head_kernel,
        out_shape=jax.ShapeDtypeStruct((m_pad, v_pad), out_dtype),
        grid_spec=pltpu.PrefetchScalarGridSpec(
            num_scalar_prefetch=0,
            grid=grid,
            in_specs=[
                # activations: (batch*seq, d_model), 2-D lane/sublane dense
                pl.BlockSpec((tm, tk), lambda vi, mi, ki: (mi, ki)),
                # weight kept in native (vocab, d_model) layout (no transpose)
                pl.BlockSpec((tn, tk), lambda vi, mi, ki: (vi, ki)),
                # bias tile
                pl.BlockSpec((1, tn), lambda vi, mi, ki: (0, vi)),
            ],
            out_specs=pl.BlockSpec((tm, tn), lambda vi, mi, ki: (mi, vi)),
            scratch_shapes=[pltpu.VMEM((tm, tn), jnp.float32)],
        ),
        compiler_params=pltpu.CompilerParams(
            dimension_semantics=("parallel", "parallel", "arbitrary"),
            vmem_limit_bytes=vmem_limit),
        cost_estimate=pl.CostEstimate(
            flops=flops, transcendentals=0, bytes_accessed=bytes_accessed),
    )(y2d, w, bias2d)

    # Strip padding, then the reshape back to (batch, seq, vocab) is free
    # (row-major contiguous).
    logits = out2d[:m, :vocab].reshape(batch, seq, vocab)
    return {'x': logits}


if __name__ == "__main__":
    # Small, deterministic config.
    model_dimension = 32
    target_vocabulary = list(range(16))           # len == 16 -> vocab size
    vocab = len(target_vocabulary)
    seq, batch = 8, 2

    key = jax.random.PRNGKey(0)
    k_y, k_w, k_b = jax.random.split(key, 3)

    y = jax.random.normal(k_y, (seq, batch, model_dimension), dtype=jnp.float32)
    # nn.Linear(model_dimension, vocab): weight (vocab, model_dim), bias (vocab,)
    weight = jax.random.normal(k_w, (vocab, model_dimension), dtype=jnp.float32) * 0.02
    bias = jax.random.normal(k_b, (vocab,), dtype=jnp.float32) * 0.02

    out = post_continuous_block(y, weight, bias)
    logits = jax.block_until_ready(out['x'])

    # Reference check (plain JAX, same bf16 operand rounding as the kernel).
    yb = y.astype(jnp.bfloat16).astype(jnp.float32)
    wb = weight.astype(jnp.bfloat16).astype(jnp.float32)
    ref = jnp.einsum('sbd,vd->bsv', yb, wb) + bias
    assert logits.shape == (batch, seq, vocab)
    assert jnp.allclose(logits, ref, atol=1e-2, rtol=1e-2)

    print("KERNEL_OK")
</pallas_src>

<mosaic_0001>
module attributes {stable_mosaic.version = 11 : i64} {
  func.func @_lm_head_kernel(%arg0: i32, %arg1: i32, %arg2: i32, %arg3: memref<16x32xbf16, #tpu.memory_space<vmem>>, %arg4: memref<128x32xbf16, #tpu.memory_space<vmem>>, %arg5: memref<1x128xf32, #tpu.memory_space<vmem>>, %arg6: memref<16x128xf32, #tpu.memory_space<vmem>>, %arg7: memref<16x128xf32, #tpu.memory_space<vmem>>) attributes {dimension_semantics = [#tpu.dimension_semantics<parallel>, #tpu.dimension_semantics<parallel>, #tpu.dimension_semantics<arbitrary>], iteration_bounds = array<i64: 1, 1, 1>, scalar_prefetch = 0 : i64, scratch_operands = 1 : i64, tpu.core_type = #tpu.core_type<tc>, window_params = [{transform_indices = @transform_0, window_bounds = array<i64: 16, 32>}, {transform_indices = @transform_1, window_bounds = array<i64: 128, 32>}, {transform_indices = @transform_2, window_bounds = array<i64: 1, 128>}, {transform_indices = @transform_3, window_bounds = array<i64: 16, 128>}]} {
    %c0_i32 = arith.constant 0 : i32
    %0 = arith.cmpi eq, %arg2, %c0_i32 : i32
    %1 = arith.extui %0 : i1 to i32
    %c0_i32_0 = arith.constant 0 : i32
    %2 = arith.cmpi ne, %1, %c0_i32_0 : i32
    scf.if %2 {
      %c0_10 = arith.constant 0 : index
      %c0_11 = arith.constant 0 : index
      %12 = vector.load %arg5[%c0_10, %c0_11] : memref<1x128xf32, #tpu.memory_space<vmem>>, vector<1x128xf32>
      %13 = vector.shape_cast %12 : vector<1x128xf32> to vector<1x128xf32>
      %14 = vector.broadcast %13 : vector<1x128xf32> to vector<16x128xf32>
      %c0_12 = arith.constant 0 : index
      %c0_13 = arith.constant 0 : index
      %15 = vector.load %arg7[%c0_12, %c0_13] : memref<16x128xf32, #tpu.memory_space<vmem>>, vector<16x128xf32>
      tpu.vector_store %arg7[%c0_12, %c0_13], %14 {strides = array<i32>} : memref<16x128xf32, #tpu.memory_space<vmem>>, vector<16x128xf32>,
    } else {
    }
    %c0 = arith.constant 0 : index
    %c0_1 = arith.constant 0 : index
    %3 = vector.load %arg7[%c0, %c0_1] : memref<16x128xf32, #tpu.memory_space<vmem>>, vector<16x128xf32>
    %c0_2 = arith.constant 0 : index
    %c0_3 = arith.constant 0 : index
    %4 = vector.load %arg3[%c0_2, %c0_3] : memref<16x32xbf16, #tpu.memory_space<vmem>>, vector<16x32xbf16>
    %c0_4 = arith.constant 0 : index
    %c0_5 = arith.constant 0 : index
    %5 = vector.load %arg4[%c0_4, %c0_5] : memref<128x32xbf16, #tpu.memory_space<vmem>>, vector<128x32xbf16>
    %cst = arith.constant dense<0.000000e+00> : vector<16x128xf32>
    %6 = tpu.matmul %4, %5, %cst {dimension_numbers = #tpu.dot_dimension_numbers<[1], [1], [0], [0], [0, 0, 1, 0], [], []>} : vector<16x32xbf16>, vector<128x32xbf16>, vector<16x128xf32> -> vector<16x128xf32>
    %7 = arith.addf %3, %6 : vector<16x128xf32>
    %c0_6 = arith.constant 0 : index
    %c0_7 = arith.constant 0 : index
    %8 = vector.load %arg7[%c0_6, %c0_7] : memref<16x128xf32, #tpu.memory_space<vmem>>, vector<16x128xf32>
    tpu.vector_store %arg7[%c0_6, %c0_7], %7 {strides = array<i32>} : memref<16x128xf32, #tpu.memory_space<vmem>>, vector<16x128xf32>,
    %c0_i32_8 = arith.constant 0 : i32
    %9 = arith.cmpi eq, %arg2, %c0_i32_8 : i32
    %10 = arith.extui %9 : i1 to i32
    %c0_i32_9 = arith.constant 0 : i32
    %11 = arith.cmpi ne, %10, %c0_i32_9 : i32
    scf.if %11 {
      %c0_10 = arith.constant 0 : index
      %c0_11 = arith.constant 0 : index
      %12 = vector.load %arg7[%c0_10, %c0_11] : memref<16x128xf32, #tpu.memory_space<vmem>>, vector<16x128xf32>
      %c0_12 = arith.constant 0 : index
      %c0_13 = arith.constant 0 : index
      %13 = vector.load %arg6[%c0_12, %c0_13] : memref<16x128xf32, #tpu.memory_space<vmem>>, vector<16x128xf32>
      tpu.vector_store %arg6[%c0_12, %c0_13], %12 {strides = array<i32>} : memref<16x128xf32, #tpu.memory_space<vmem>>, vector<16x128xf32>,
    } else {
    }
    return
  }
  func.func @transform_0(%arg0: i32, %arg1: i32, %arg2: i32) -> (i32, i32) {
    %c0_i32 = arith.constant 0 : i32
    return %arg1, %arg2 : i32, i32
  }
  func.func @transform_1(%arg0: i32, %arg1: i32, %arg2: i32) -> (i32, i32) {
    %c0_i32 = arith.constant 0 : i32
    return %arg0, %arg2 : i32, i32
  }
  func.func @transform_2(%arg0: i32, %arg1: i32, %arg2: i32) -> (i32, i32) {
    %c0_i32 = arith.constant 0 : i32
    %c0_i32_0 = arith.constant 0 : i32
    return %c0_i32, %arg0 : i32, i32
  }
  func.func @transform_3(%arg0: i32, %arg1: i32, %arg2: i32) -> (i32, i32) {
    %c0_i32 = arith.constant 0 : i32
    return %arg1, %arg0 : i32, i32
  }
}

</mosaic_0001>

<llo_original>
// kernel: tpu_custom_call.1
$region0: #{tpu_custom_call.1}
  #allocation0 [shape = 'u32[]', space=smem, size = 0x4, offset = 0x4, fixed_abs, tag = 'smem constant byte address 0x4 - core index']
  #allocation1 [shape = 'u32[144,128]{1,0:T(1,128)}', space=vmem, size = 0x12000, scoped, tag = 'internal scratch']
  #allocation2 [shape = 'f32[16,128]{1,0:T(8,128)}', space=vmem, size = 0x2000, scoped, tag = 'scratch operand']
  %s0 = inlined_call_operand.vmem [shape: bf16[16,32], index: 0, kind: input, shape index: {}]
  %s1 = inlined_call_operand.vmem [shape: bf16[128,32], index: 1, kind: input, shape index: {}]
  %s2 = inlined_call_operand.vmem [shape: f32[1,128], index: 2, kind: input, shape index: {}]
  %s3 = inlined_call_operand.hbm [shape: f32[16,128], index: 3, kind: output, shape index: {}]
  %s4 = sld [smem:[#allocation0]]
  $region30: #{tpu_custom_call.1} parent=0
    _
  %s6 = ssub.s32 1, %s4
  %s7 = scalar_select 0, %s6, %s4
  $region1: #{tpu_custom_call.1} parent=0
    #allocation3 [shape = 'u8[8192]{0}', space=vmem, size = 0x2000, scoped, tag = 'output window, operand 0, single buffered']
    #allocation4 [shape = 's32[1]{0}', space=sflag, size = 0x4, scoped, tag = 'scoped memory for tpu_custom_call.1']
    %8 = vsyncpa [#allocation4], 0
    // Predicated region
    $region2: #{tpu_custom_call.1} parent=1 // pred_check
      _
    $region3: #{tpu_custom_call.1} parent=1 // pred_check_branch
      %10 = sbr.rel (0) target = $region5
    $region4: #{tpu_custom_call.1} parent=1 // pred_region
      _
    $region5: #{tpu_custom_call.1} parent=1 // pred_fallthru
      _
    // Predicated region
    $region6: #{tpu_custom_call.1} parent=1 // pred_check
      _
    $region7: #{tpu_custom_call.1} parent=1 // pred_check_branch
      %12 = sbr.rel (0) target = $region9
    $region8: #{tpu_custom_call.1} parent=1 // pred_region
      _
    $region9: #{tpu_custom_call.1} parent=1 // pred_fallthru
      _
    // Predicated region
    $region10: #{tpu_custom_call.1} parent=1 // pred_check
      _
    $region11: #{tpu_custom_call.1} parent=1 // pred_check_branch
      %14 = sbr.rel (0) target = $region13
    $region12: #{tpu_custom_call.1} parent=1 // pred_region
      _
    $region13: #{tpu_custom_call.1} parent=1 // pred_fallthru
      _
    %p16 = scmp.eq.s32.totalorder 0, 0
    // Predicated region
    $region14: #{tpu_custom_call.1} parent=1 // pred_check
      %p17 = pneg %p16
    $region15: #{tpu_custom_call.1} parent=1 // pred_check_branch
      %19 = sbr.rel (%p17) target = $region17
    $region16: #{tpu_custom_call.1} parent=1 // pred_region
      %v20 = vld [vmem:[%s2] sm:$0x1]
      %v22 = vlaneseq
      %v23 = vshrl.u32 %v22, 7
      %v24 = vsub.s32 0, %v23
      %v25 = vrot.slane %v20, %v24
      %27 = vst [vmem:[#allocation2] sm:$0xff] %v25
      %28 = vst [vmem:[#allocation2 + $0x8] sm:$0xff] %v25
    $region17: #{tpu_custom_call.1} parent=1 // pred_fallthru
      _
    %v29 = vld [vmem:[#allocation2] sm:$0xff]
    %v30 = vld [vmem:[#allocation2 + $0x8] sm:$0xff]
    %v31 = vld [vmem:[%s0] sm:$0xf]
    %v32 = vld [vmem:[%s0 + $0x4] sm:$0xf]
    %v33 = vld [vmem:[%s1] sm:$0xf]
    %v34 = vld [vmem:[%s1 + $0x4] sm:$0xf]
    %v35 = vld [vmem:[%s1 + $0x8] sm:$0xf]
    %v36 = vld [vmem:[%s1 + $0xc] sm:$0xf]
    %v37 = vld [vmem:[%s1 + $0x10] sm:$0xf]
    %v38 = vld [vmem:[%s1 + $0x14] sm:$0xf]
    %v39 = vld [vmem:[%s1 + $0x18] sm:$0xf]
    %v40 = vld [vmem:[%s1 + $0x1c] sm:$0xf]
    %v41 = vld [vmem:[%s1 + $0x20] sm:$0xf]
    %v42 = vld [vmem:[%s1 + $0x24] sm:$0xf]
    %v43 = vld [vmem:[%s1 + $0x28] sm:$0xf]
    %v44 = vld [vmem:[%s1 + $0x2c] sm:$0xf]
    %v45 = vld [vmem:[%s1 + $0x30] sm:$0xf]
    %v46 = vld [vmem:[%s1 + $0x34] sm:$0xf]
    %v47 = vld [vmem:[%s1 + $0x38] sm:$0xf]
    %v48 = vld [vmem:[%s1 + $0x3c] sm:$0xf]
    %v51 = vunpack.c.l.b16 %v31
    %v52 = vunpack.c.l.b16 %v32
    %v53 = vpack.c.b16 %v52, %v51
    %v70 = vunpack.c.l.b16 %v33
    %v71 = vunpack.c.l.b16 %v34
    %v72 = vunpack.c.l.b16 %v35
    %v73 = vunpack.c.l.b16 %v36
    %v74 = vunpack.c.l.b16 %v37
    %v75 = vunpack.c.l.b16 %v38
    %v76 = vunpack.c.l.b16 %v39
    %v77 = vunpack.c.l.b16 %v40
    %v78 = vunpack.c.l.b16 %v41
    %v79 = vunpack.c.l.b16 %v42
    %v80 = vunpack.c.l.b16 %v43
    %v81 = vunpack.c.l.b16 %v44
    %v82 = vunpack.c.l.b16 %v45
    %v83 = vunpack.c.l.b16 %v46
    %v84 = vunpack.c.l.b16 %v47
    %v85 = vunpack.c.l.b16 %v48
    %v86 = vpack.c.b16 %v71, %v70
    %v87 = vpack.c.b16 %v73, %v72
    %v88 = vpack.c.b16 %v75, %v74
    %v89 = vpack.c.b16 %v77, %v76
    %v90 = vpack.c.b16 %v79, %v78
    %v91 = vpack.c.b16 %v81, %v80
    %v92 = vpack.c.b16 %v83, %v82
    %v93 = vpack.c.b16 %v85, %v84
    %vm94 = vcmask 261120
    %v96 = vsel %vm94, %v53, 0
    %v99 = vsel %vm94, %v86, 0
    %v102 = vsel %vm94, %v87, 0
    %v105 = vsel %vm94, %v88, 0
    %v108 = vsel %vm94, %v89, 0
    %v111 = vsel %vm94, %v90, 0
    %v114 = vsel %vm94, %v91, 0
    %v117 = vsel %vm94, %v92, 0
    %v120 = vsel %vm94, %v93, 0
    %122 = vmatprep.subr.bf16.mxu0 0
    %123 = vmatpush1.bf16.xpose.msra.mxu0 %v99
    %124 = vmatprep.subr.bf16.mxu0 0
    %125 = vmatpush1.bf16.xpose.msra.mxu0 %v102
    %126 = vmatprep.subr.bf16.mxu0 0
    %127 = vmatpush1.bf16.xpose.msra.mxu0 %v105
    %128 = vmatprep.subr.bf16.mxu0 0
    %129 = vmatpush1.bf16.xpose.msra.mxu0 %v108
    %130 = vmatprep.subr.bf16.mxu0 0
    %131 = vmatpush1.bf16.xpose.msra.mxu0 %v111
    %132 = vmatprep.subr.bf16.mxu0 0
    %133 = vmatpush1.bf16.xpose.msra.mxu0 %v114
    %134 = vmatprep.subr.bf16.mxu0 0
    %135 = vmatpush1.bf16.xpose.msra.mxu0 %v117
    %136 = vmatprep.subr.bf16.mxu0 0
    %137 = vmatpush1.bf16.xpose.msra.mxu0 %v120
    %138 = vmatprep.subr.bf16.mxu0 0
    %139 = vmatpush1.bf16.xpose.msra.mxu0 0
    %140 = vmatprep.subr.bf16.mxu0 0
    %141 = vmatpush1.bf16.xpose.msra.mxu0 0
    %142 = vmatprep.subr.bf16.mxu0 0
    %143 = vmatpush1.bf16.xpose.msra.mxu0 0
    %144 = vmatprep.subr.bf16.mxu0 0
    %145 = vmatpush1.bf16.xpose.msra.mxu0 0
    %146 = vmatprep.subr.bf16.mxu0 0
    %147 = vmatpush1.bf16.xpose.msra.mxu0 0
    %148 = vmatprep.subr.bf16.mxu0 0
    %149 = vmatpush1.bf16.xpose.msra.mxu0 0
    %150 = vmatprep.subr.bf16.mxu0 0
    %151 = vmatpush1.bf16.xpose.msra.mxu0 0
    %152 = vmatprep.subr.bf16.mxu0 0
    %153 = vmatpush1.bf16.xpose.msra.mxu0 0
    %154 = vmatprep.mubr.bf16.mxu0 0
    %155 = vmatmul.mubr.bf16.gmra.mrb[0].mxu0 %v96
    %v156 = vpop.f32.mrb[0].mxu0
    %v157 = vadd.f32 0.0, %v156
    %v158 = vpop.f32.mrb[0].mxu0
    %v159 = vpop.f32.mrb[0].mxu0
    %v160 = vadd.f32 0.0, %v159
    %v161 = vpop.f32.mrb[0].mxu0
    %162 = vdwg.mxu0
    %v163 = vadd.f32 %v29, %v157
    %v164 = vadd.f32 %v30, %v160
    %165 = vst [vmem:[#allocation2] sm:$0xff] %v163
    %166 = vst [vmem:[#allocation2 + $0x8] sm:$0xff] %v164
    // Predicated region
    $region18: #{tpu_custom_call.1} parent=1 // pred_check
      %p167 = pneg %p16
    $region19: #{tpu_custom_call.1} parent=1 // pred_check_branch
      %169 = sbr.rel (%p167) target = $region21
    $region20: #{tpu_custom_call.1} parent=1 // pred_region
      %v170 = vld [vmem:[#allocation2] sm:$0xff]
      %v171 = vld [vmem:[#allocation2 + $0x8] sm:$0xff]
      %172 = vst [vmem:[#allocation3] sm:$0xff] %v170
      %173 = vst [vmem:[#allocation3 + $0x8] sm:$0xff] %v171
    $region21: #{tpu_custom_call.1} parent=1 // pred_fallthru
      _
    // Predicated region
    $region22: #{tpu_custom_call.1} parent=1 // pred_check
      _
    $region23: #{tpu_custom_call.1} parent=1 // pred_check_branch
      %175 = sbr.rel (0) target = $region25
    $region24: #{tpu_custom_call.1} parent=1 // pred_region
      %s177 = ssub.s32 256, 256
      %178 = vsyncadd [#allocation4], %s177
      %s179 = sshll.u32 [#allocation3], 4
      %s180 = int_to_ptr.vmem [resolvable:$true] %s179
      %185 = dma.vmem_to_hbm [thread:$0]  %s180, 256, %s3, [#allocation4], 128, 128, 8
    $region25: #{tpu_custom_call.1} parent=1 // pred_fallthru
      _
    // Predicated region
    $region26: #{tpu_custom_call.1} parent=1 // pred_check
      _
    $region27: #{tpu_custom_call.1} parent=1 // pred_check_branch
      %187 = sbr.rel (0) target = $region29
    $region28: #{tpu_custom_call.1} parent=1 // pred_region
      %188 = dma.done [#allocation4], 256
    $region29: #{tpu_custom_call.1} parent=1 // pred_fallthru
      _
    %189 = vsyncpa [#allocation4], 1

</llo_original>
